<compile_context>
chip_gen: v7x
topology: tpu7x:2x2x1
jax: 0.10.0
libtpu: 0.0.40
codegen_flags: <defaults>
</compile_context>

<pallas_src>
import functools

import jax
import jax.numpy as jnp
from jax.experimental import pallas as pl
from jax.experimental.pallas import tpu as pltpu


def _identity_kernel(x_ref, o_ref):
    # The wrapped identity module's forward: output tile == input tile.
    o_ref[...] = x_ref[...]


_SMALL_BYTES = 2 * 1024 * 1024   # whole-array single-block fast path
_LANES_WIDE = 512                # preferred lane-dense slab width (mult of 128)
_LANES_NARROW = 128


@functools.lru_cache(maxsize=None)
def _chip_tuning():
    """Returns (target_block_bytes, vmem_limit_bytes_or_None), chip-gated."""
    try:
        vmem = pltpu.get_tpu_info().vmem_capacity_bytes
    except Exception:
        # Unknown hardware: conservative defaults safe on every generation.
        return 2 * 1024 * 1024, None
    if vmem <= 64 * 1024 * 1024:
        # v7x-class: 64 MiB VMEM, ~3.2 TB/s HBM -> bigger blocks amortize the
        # ~0.35 us per-grid-step overhead; 4 MiB x 4 double buffers = 16 MiB,
        # explicitly allowed via vmem_limit_bytes.
        return 4 * 1024 * 1024, 32 * 1024 * 1024
    # v5e / v6e (128 MiB VMEM): 2 MiB blocks already reach ~85% of HBM
    # roofline and 2 in + 2 out buffers stay under v5e's 16 MiB scoped default.
    return 2 * 1024 * 1024, None


def _compiler_params(vmem_limit):
    if vmem_limit is None:
        return pltpu.CompilerParams(dimension_semantics=("parallel",))
    return pltpu.CompilerParams(dimension_semantics=("parallel",),
                                vmem_limit_bytes=vmem_limit)


def _single_block_copy(x):
    """Whole array as one VMEM block (no grid, no reshape). Small arrays."""
    return pl.pallas_call(
        _identity_kernel,
        out_shape=jax.ShapeDtypeStruct(x.shape, x.dtype),
    )(x)


def _tiled_copy_2d(x2d, tile_rows, vmem_limit):
    """Lane-dense (rows, lanes) copy; ragged last block handled by Pallas."""
    rows, lanes = x2d.shape
    itemsize = jnp.dtype(x2d.dtype).itemsize
    return pl.pallas_call(
        _identity_kernel,
        out_shape=jax.ShapeDtypeStruct((rows, lanes), x2d.dtype),
        grid_spec=pltpu.PrefetchScalarGridSpec(
            num_scalar_prefetch=0,
            grid=(pl.cdiv(rows, tile_rows),),
            in_specs=[pl.BlockSpec((tile_rows, lanes), lambda i: (i, 0))],
            out_specs=pl.BlockSpec((tile_rows, lanes), lambda i: (i, 0)),
        ),
        compiler_params=_compiler_params(vmem_limit),
        cost_estimate=pl.CostEstimate(
            flops=0, transcendentals=0,
            bytes_accessed=2 * rows * lanes * itemsize),
    )(x2d)


def _tiled_copy_leading(x, d0_tile, vmem_limit):
    """Tile along the leading axis with trailing dims full (contiguous DMAs)."""
    ndim = x.ndim
    itemsize = jnp.dtype(x.dtype).itemsize
    block = (d0_tile,) + x.shape[1:]
    index_map = lambda i: (i,) + (0,) * (ndim - 1)
    return pl.pallas_call(
        _identity_kernel,
        out_shape=jax.ShapeDtypeStruct(x.shape, x.dtype),
        grid_spec=pltpu.PrefetchScalarGridSpec(
            num_scalar_prefetch=0,
            grid=(pl.cdiv(x.shape[0], d0_tile),),
            in_specs=[pl.BlockSpec(block, index_map)],
            out_specs=pl.BlockSpec(block, index_map),
        ),
        compiler_params=_compiler_params(vmem_limit),
        cost_estimate=pl.CostEstimate(
            flops=0, transcendentals=0,
            bytes_accessed=2 * x.size * itemsize),
    )(x)


def _pallas_identity(x):
    """Identity pass-through of an arbitrary-shaped array via a Pallas copy."""
    if x.size == 0:
        return x
    if x.ndim == 0:
        return _single_block_copy(x.reshape(1, 1)).reshape(())

    itemsize = jnp.dtype(x.dtype).itemsize
    total = int(x.size)
    total_bytes = total * itemsize

    # Fast path: small arrays -> single whole-array block.  One launch, one
    # DMA each way, zero reshape/pad/slice overhead.
    if total_bytes <= _SMALL_BYTES:
        return _single_block_copy(x)

    target_block_bytes, vmem_limit = _chip_tuning()

    # Lane-dense path: flat (rows, lanes) view with lanes a multiple of 128
    # (unmasked vector stores, contiguous full-width block DMAs).
    lanes = None
    if total % _LANES_WIDE == 0:
        lanes = _LANES_WIDE
    elif total % _LANES_NARROW == 0:
        lanes = _LANES_NARROW

    if lanes is not None:
        rows = total // lanes
        # Sublane multiple so packed (sub-32-bit) dtypes keep full tiles.
        # TODO(synk): sub-byte dtypes (int4/fp4) would want 64+ row multiples;
        # they remain correct here, just with partially masked tiles.
        sub = max(8, 32 // max(itemsize, 1))
        target_rows = max(sub,
                          (target_block_bytes // (lanes * itemsize)) // sub * sub)
        # Guarantee >= 2 grid steps where possible so both v7x TensorCores
        # share the copy under dimension_semantics=("parallel",).
        half_rows = pl.cdiv(pl.cdiv(rows, 2), sub) * sub
        tile_rows = min(rows, target_rows, max(sub, half_rows))
        y2d = _tiled_copy_2d(x.reshape(rows, lanes), tile_rows, vmem_limit)
        return y2d.reshape(x.shape)

    # Large array whose element count is not a multiple of 128: tile along the
    # leading axis keeping all trailing dims full, so each block DMA is one
    # contiguous HBM region and no host-side pad/slice pass is ever emitted.
    if x.ndim >= 2:
        d0 = x.shape[0]
        inner_bytes = (total // d0) * itemsize
        d0_tile = max(1, min(d0, target_block_bytes // max(inner_bytes, 1)))
        if d0 >= 2:
            # Keep at least 2 grid steps for megacore sharding.
            d0_tile = min(d0_tile, pl.cdiv(d0, 2))
        if x.ndim == 2 and d0_tile < d0:
            # For 2-D blocks the sublane dim must be a multiple of 8 or full.
            d0_tile = max(8, (d0_tile // 8) * 8)
            if d0_tile >= d0:
                d0_tile = d0
        return _tiled_copy_leading(x, d0_tile, vmem_limit)

    # TODO(synk): huge 1-D arrays with a non-128-multiple length fall back to
    # a single whole-array block (rare; fine while it fits in VMEM).
    return _single_block_copy(x)


class IdentityModulePallas:
    """Stand-in for the wrapped `module`: forward(x) -> x, computed in Pallas."""

    def forward(self, x):
        return _pallas_identity(x)


class DataSerial:
    """
    Wrapper to create consistent API with DataParallel (JAX/Pallas port).
    Pure delegation: forward(*inputs, **kwargs) -> module.forward(*inputs, **kwargs)
    """

    def __init__(self, module):
        self.module = module

    def forward(self, *inputs, **kwargs):
        return self.module.forward(*inputs, **kwargs)


if __name__ == "__main__":
    model = DataSerial(IdentityModulePallas())

    # Small NCHW input: batch=2, channels=4, spatial=16x16 (fast path).
    x = jax.random.normal(jax.random.PRNGKey(0), (2, 4, 16, 16),
                          dtype=jnp.float32)
    y = jax.block_until_ready(model.forward(x))
    assert y.shape == x.shape and y.dtype == x.dtype
    assert bool(jnp.array_equal(y, x)), "DataSerial pass-through mismatch"

    # Odd shape, element count not a multiple of 128 (float32, fast path).
    x2 = jax.random.normal(jax.random.PRNGKey(1), (3, 5, 7, 9),
                           dtype=jnp.float32)
    y2 = jax.block_until_ready(model.forward(x2))
    assert y2.shape == x2.shape and bool(jnp.array_equal(y2, x2))

    # bf16 (sublane-packed) small input.
    x3 = jax.random.normal(jax.random.PRNGKey(2), (2, 4, 16, 16),
                           dtype=jnp.bfloat16)
    y3 = jax.block_until_ready(model.forward(x3))
    assert y3.shape == x3.shape and y3.dtype == x3.dtype
    assert bool(jnp.all(y3 == x3))

    # Larger lane-aligned input: exercises the tiled (rows, 512) pipeline with
    # a multi-step "parallel" grid and no pad/slice passes.
    x4 = jax.random.normal(jax.random.PRNGKey(3), (4, 512, 1024),
                           dtype=jnp.float32)
    y4 = jax.block_until_ready(model.forward(x4))
    assert y4.shape == x4.shape and bool(jnp.array_equal(y4, x4))

    # Multiple of 128 but not of 512, rows not a multiple of the tile:
    # exercises the narrow-lane path with a ragged last block.
    x5 = jax.random.normal(jax.random.PRNGKey(4), (1001, 128, 6),
                           dtype=jnp.float32)
    y5 = jax.block_until_ready(model.forward(x5))
    assert y5.shape == x5.shape and bool(jnp.array_equal(y5, x5))

    # Large input whose element count is not a multiple of 128: exercises the
    # leading-axis tiling path (no pad, contiguous block DMAs).
    x6 = jax.random.normal(jax.random.PRNGKey(5), (9, 251, 251),
                           dtype=jnp.float32)
    y6 = jax.block_until_ready(model.forward(x6))
    assert y6.shape == x6.shape and bool(jnp.array_equal(y6, x6))

    print("KERNEL_OK")
</pallas_src>

<mosaic_0001>
module attributes {stable_mosaic.version = 11 : i64} {
  func.func @_identity_kernel(%arg0: memref<2x4x16x16xf32, #tpu.memory_space<vmem>>, %arg1: memref<2x4x16x16xf32, #tpu.memory_space<vmem>>) attributes {dimension_semantics = [], scalar_prefetch = 0 : i64, scratch_operands = 0 : i64, tpu.core_type = #tpu.core_type<tc>} {
    %c0 = arith.constant 0 : index
    %c0_0 = arith.constant 0 : index
    %c0_1 = arith.constant 0 : index
    %c0_2 = arith.constant 0 : index
    %0 = vector.load %arg0[%c0, %c0_0, %c0_1, %c0_2] : memref<2x4x16x16xf32, #tpu.memory_space<vmem>>, vector<2x4x16x16xf32>
    %c0_3 = arith.constant 0 : index
    %c0_4 = arith.constant 0 : index
    %c0_5 = arith.constant 0 : index
    %c0_6 = arith.constant 0 : index
    %1 = vector.load %arg1[%c0_3, %c0_4, %c0_5, %c0_6] : memref<2x4x16x16xf32, #tpu.memory_space<vmem>>, vector<2x4x16x16xf32>
    tpu.vector_store %arg1[%c0_3, %c0_4, %c0_5, %c0_6], %0 {strides = array<i32>} : memref<2x4x16x16xf32, #tpu.memory_space<vmem>>, vector<2x4x16x16xf32>,
    return
  }
}

</mosaic_0001>

<llo_original>
// kernel: tpu_custom_call.1
$region0: #{tpu_custom_call.1}
  #allocation0 [shape = 'u32[]', space=smem, size = 0x4, offset = 0x4, fixed_abs, tag = 'smem constant byte address 0x4 - core index']
  #allocation1 [shape = 'u32[144,128]{1,0:T(1,128)}', space=vmem, size = 0x12000, scoped, tag = 'internal scratch']
  %s0 = inlined_call_operand.hbm [shape: f32[2,4,16,16], index: 0, kind: input, shape index: {}]
  %s1 = inlined_call_operand.hbm [shape: f32[2,4,16,16], index: 1, kind: output, shape index: {}]
  %s2 = sld [smem:[#allocation0]]
  $region18: #{tpu_custom_call.1} parent=0
    _
  %s4 = ssub.s32 1, %s2
  %s5 = scalar_select 0, %s4, %s2
  $region1: #{tpu_custom_call.1} parent=0
    #allocation2 [shape = 'u8[65536]{0}', space=vmem, size = 0x10000, scoped, tag = 'input window, operand 0, single buffered']
    #allocation3 [shape = 's32[1]{0}', space=sflag, size = 0x4, scoped, tag = 'scoped memory for tpu_custom_call.1']
    #allocation4 [shape = 's32[1]{0}', space=sflag, size = 0x4, scoped, tag = 'scoped memory for tpu_custom_call.1']
    #allocation5 [shape = 'u8[65536]{0}', space=vmem, size = 0x10000, scoped, tag = 'output window, operand 0, single buffered']
    %6 = vsyncpa [#allocation3], 0
    %7 = vsyncpa [#allocation4], 0
    // Predicated region
    $region2: #{tpu_custom_call.1} parent=1 // pred_check
      _
    $region3: #{tpu_custom_call.1} parent=1 // pred_check_branch
      %9 = sbr.rel (0) target = $region5
    $region4: #{tpu_custom_call.1} parent=1 // pred_region
      %s11 = ssub.s32 2048, 2048
      %12 = vsyncadd [#allocation3], %s11
      %s13 = sshll.u32 [#allocation2], 4
      %s14 = int_to_ptr.vmem [resolvable:$true] %s13
      %19 = dma.hbm_to_vmem [thread:$0]  %s0, 2048, %s14, [#allocation3], 128, 128, 8
    $region5: #{tpu_custom_call.1} parent=1 // pred_fallthru
      _
    // Predicated region
    $region6: #{tpu_custom_call.1} parent=1 // pred_check
      _
    $region7: #{tpu_custom_call.1} parent=1 // pred_check_branch
      %21 = sbr.rel (0) target = $region9
    $region8: #{tpu_custom_call.1} parent=1 // pred_region
      %22 = dma.done [#allocation3], 2048
    $region9: #{tpu_custom_call.1} parent=1 // pred_fallthru
      _
    %v23 = vld [vmem:[#allocation2] sm:$0xff]
    %v24 = vld [vmem:[#allocation2 + $0x8] sm:$0xff]
    %v25 = vld [vmem:[#allocation2 + $0x10] sm:$0xff]
    %v26 = vld [vmem:[#allocation2 + $0x18] sm:$0xff]
    %v27 = vld [vmem:[#allocation2 + $0x20] sm:$0xff]
    %v28 = vld [vmem:[#allocation2 + $0x28] sm:$0xff]
    %v29 = vld [vmem:[#allocation2 + $0x30] sm:$0xff]
    %v30 = vld [vmem:[#allocation2 + $0x38] sm:$0xff]
    %v31 = vld [vmem:[#allocation2 + $0x40] sm:$0xff]
    %v32 = vld [vmem:[#allocation2 + $0x48] sm:$0xff]
    %v33 = vld [vmem:[#allocation2 + $0x50] sm:$0xff]
    %v34 = vld [vmem:[#allocation2 + $0x58] sm:$0xff]
    %v35 = vld [vmem:[#allocation2 + $0x60] sm:$0xff]
    %v36 = vld [vmem:[#allocation2 + $0x68] sm:$0xff]
    %v37 = vld [vmem:[#allocation2 + $0x70] sm:$0xff]
    %v38 = vld [vmem:[#allocation2 + $0x78] sm:$0xff]
    %vm39 = vcmask 130048
    %40 = vst.msk [vmem:[#allocation5] sm:$0xff] %vm39, %v23
    %41 = vst.msk [vmem:[#allocation5 + $0x8] sm:$0xff] %vm39, %v24
    %42 = vst.msk [vmem:[#allocation5 + $0x10] sm:$0xff] %vm39, %v25
    %43 = vst.msk [vmem:[#allocation5 + $0x18] sm:$0xff] %vm39, %v26
    %44 = vst.msk [vmem:[#allocation5 + $0x20] sm:$0xff] %vm39, %v27
    %45 = vst.msk [vmem:[#allocation5 + $0x28] sm:$0xff] %vm39, %v28
    %46 = vst.msk [vmem:[#allocation5 + $0x30] sm:$0xff] %vm39, %v29
    %47 = vst.msk [vmem:[#allocation5 + $0x38] sm:$0xff] %vm39, %v30
    %48 = vst.msk [vmem:[#allocation5 + $0x40] sm:$0xff] %vm39, %v31
    %49 = vst.msk [vmem:[#allocation5 + $0x48] sm:$0xff] %vm39, %v32
    %50 = vst.msk [vmem:[#allocation5 + $0x50] sm:$0xff] %vm39, %v33
    %51 = vst.msk [vmem:[#allocation5 + $0x58] sm:$0xff] %vm39, %v34
    %52 = vst.msk [vmem:[#allocation5 + $0x60] sm:$0xff] %vm39, %v35
    %53 = vst.msk [vmem:[#allocation5 + $0x68] sm:$0xff] %vm39, %v36
    %54 = vst.msk [vmem:[#allocation5 + $0x70] sm:$0xff] %vm39, %v37
    %55 = vst.msk [vmem:[#allocation5 + $0x78] sm:$0xff] %vm39, %v38
    // Predicated region
    $region10: #{tpu_custom_call.1} parent=1 // pred_check
      _
    $region11: #{tpu_custom_call.1} parent=1 // pred_check_branch
      %57 = sbr.rel (0) target = $region13
    $region12: #{tpu_custom_call.1} parent=1 // pred_region
      %s59 = ssub.s32 2048, 2048
      %60 = vsyncadd [#allocation4], %s59
      %s61 = sshll.u32 [#allocation5], 4
      %s62 = int_to_ptr.vmem [resolvable:$true] %s61
      %67 = dma.vmem_to_hbm [thread:$0]  %s62, 2048, %s1, [#allocation4], 128, 128, 8
    $region13: #{tpu_custom_call.1} parent=1 // pred_fallthru
      _
    // Predicated region
    $region14: #{tpu_custom_call.1} parent=1 // pred_check
      _
    $region15: #{tpu_custom_call.1} parent=1 // pred_check_branch
      %69 = sbr.rel (0) target = $region17
    $region16: #{tpu_custom_call.1} parent=1 // pred_region
      %70 = dma.done [#allocation4], 2048
    $region17: #{tpu_custom_call.1} parent=1 // pred_fallthru
      _
    %71 = vsyncpa [#allocation3], 1
    %72 = vsyncpa [#allocation4], 1

</llo_original>
